<compile_context>
chip_gen: v6e
topology: v6e:2x2x1
jax: 0.10.0
libtpu: 0.0.40
codegen_flags: <defaults>
</compile_context>

<pallas_src>
import jax
import jax.numpy as jnp
from jax.experimental import pallas as pl
from jax.experimental.pallas import tpu as pltpu


def _round_up(n, m):
    return ((n + m - 1) // m) * m


def _pick_row_tile(n_rows, fp, *, target_bytes=2 << 20):
    """Row tile: ~target_bytes per f32 x-tile, multiple of 128 (fills MXU M and
    v5e's 4x 128x128 MXUs), clamped so the batch dim is never padded and the
    row grid keeps >= 2 steps when there is enough work (v7x: 2 TensorCores)."""
    per_row = fp * 4
    tm = (target_bytes // per_row) // 128 * 128
    tm = max(128, min(2048, tm))
    if n_rows >= 256:
        tm = min(tm, _round_up((n_rows + 1) // 2, 128))
    tm = min(tm, _round_up(n_rows, 8))
    return max(tm, 8)


def residual_block_kernel(x_ref, w1_ref, b1_ref, w2_ref, b2_ref, o_ref):
    x = x_ref[...]                                            # [tm, Fp] (f32)
    # first Linear + ReLU (MXU matmul, f32 accumulation)
    h = jnp.dot(x.astype(w1_ref.dtype), w1_ref[...],
                preferred_element_type=jnp.float32) + b1_ref[...]
    h = jnp.maximum(h, 0.0)
    # second Linear
    y = jnp.dot(h.astype(w2_ref.dtype), w2_ref[...],
                preferred_element_type=jnp.float32) + b2_ref[...]
    # residual add in f32 off the MXU result, single cast to output dtype
    o_ref[...] = (x.astype(jnp.float32) + y).astype(o_ref.dtype)


def prepare_params(w1_t, b1, w2_t, b2, *, weight_dtype=jnp.bfloat16):
    """One-time parameter prep: pad feature dims to a lane-dense multiple of
    128 and cast weights (default bf16 MXU fast path).  w*_t are pre-transposed
    [in, out] so y = x @ w_t matches PyTorch's x @ W.T."""
    f = w1_t.shape[0]
    fp = _round_up(max(f, 128), 128)
    pad = fp - f
    # Zero padding is benign: padded columns/rows contribute 0 through both
    # linears, the zero-padded biases, and the residual.
    w1p = jnp.pad(w1_t, ((0, pad), (0, pad))).astype(weight_dtype)
    w2p = jnp.pad(w2_t, ((0, pad), (0, pad))).astype(weight_dtype)
    b1p = jnp.pad(b1, (0, pad)).astype(jnp.float32).reshape(1, fp)
    b2p = jnp.pad(b2, (0, pad)).astype(jnp.float32).reshape(1, fp)
    return (w1p, b1p, w2p, b2p)


def residual_block(x, params, *, block_rows=None):
    """x: [N, F] activations; params from prepare_params()."""
    w1p, b1p, w2p, b2p = params
    fp = w1p.shape[0]
    n, f = x.shape
    assert f <= fp, "params were prepared for a smaller feature size"

    # Feature padding only when F is not already lane-dense.
    x_in = x if f == fp else jnp.pad(x, ((0, 0), (0, fp - f)))

    tm = block_rows if block_rows is not None else _pick_row_tile(n, fp)
    grid = (pl.cdiv(n, tm),)   # ragged last block; rows are independent

    w_itemsize = jnp.dtype(w1p.dtype).itemsize
    x_itemsize = jnp.dtype(x.dtype).itemsize
    weight_bytes = 2 * fp * fp * w_itemsize + 2 * fp * 4          # resident (Buffered(1))
    act_bytes = 2 * tm * fp * 4 + 2 * tm * fp * x_itemsize        # double-buffered x / out
    vmem_limit = int(1.25 * (weight_bytes + act_bytes)) + (8 << 20)
    try:  # leave headroom below physical VMEM (64 MiB/TC v7x, 128 MiB v5e/v6e)
        phys_vmem = int(getattr(pltpu.get_tpu_info(), "vmem_capacity_bytes", 64 << 20))
    except Exception:
        phys_vmem = 64 << 20
    vmem_limit = max(32 << 20, min(vmem_limit, phys_vmem - (16 << 20), 100 << 20))

    cost = pl.CostEstimate(
        flops=4 * n * fp * fp,                                    # two N x Fp x Fp matmuls
        transcendentals=0,
        bytes_accessed=n * fp * (4 + x_itemsize) + weight_bytes,
    )

    # Grid-invariant operands: single-buffer (their block index never changes).
    const = dict(pipeline_mode=pl.Buffered(1))
    # If xprof shows exposed DMA on the x/out streams, bump those two specs to
    # pipeline_mode=pl.Buffered(3) (check v7x VMEM headroom first).
    out = pl.pallas_call(
        residual_block_kernel,
        out_shape=jax.ShapeDtypeStruct((n, fp), x.dtype),
        grid_spec=pltpu.PrefetchScalarGridSpec(
            num_scalar_prefetch=0,
            grid=grid,
            in_specs=[
                pl.BlockSpec((tm, fp), lambda i: (i, 0)),            # x tile
                pl.BlockSpec((fp, fp), lambda i: (0, 0), **const),   # W1^T
                pl.BlockSpec((1, fp), lambda i: (0, 0), **const),    # b1
                pl.BlockSpec((fp, fp), lambda i: (0, 0), **const),   # W2^T
                pl.BlockSpec((1, fp), lambda i: (0, 0), **const),    # b2
            ],
            out_specs=pl.BlockSpec((tm, fp), lambda i: (i, 0)),
        ),
        compiler_params=pltpu.CompilerParams(
            dimension_semantics=("parallel",),
            vmem_limit_bytes=vmem_limit,
        ),
        cost_estimate=cost,
    )(x_in, w1p, b1p, w2p, b2p)
    return out if f == fp else out[:, :f]


def residual_block_ref(x, w1_t, b1, w2_t, b2, weight_dtype=jnp.float32):
    """Pure-JAX reference mirroring the kernel's dtype choices."""
    h = jnp.dot(x.astype(weight_dtype), w1_t.astype(weight_dtype),
                preferred_element_type=jnp.float32) + b1
    h = jnp.maximum(h, 0.0)
    y = jnp.dot(h.astype(weight_dtype), w2_t.astype(weight_dtype),
                preferred_element_type=jnp.float32) + b2
    return (x.astype(jnp.float32) + y).astype(x.dtype)


def _make_params(key, features):
    k1, kb1, k2, kb2 = jax.random.split(key, 4)
    bound = 1.0 / jnp.sqrt(jnp.float32(features))
    # PyTorch Linear weight is [out, in]; we store the transpose [in, out].
    w1 = jax.random.uniform(k1, (features, features), jnp.float32, -bound, bound)
    b1 = jax.random.uniform(kb1, (features,), jnp.float32, -bound, bound)
    w2 = jax.random.uniform(k2, (features, features), jnp.float32, -bound, bound)
    b2 = jax.random.uniform(kb2, (features,), jnp.float32, -bound, bound)
    return w1.T, b1, w2.T, b2


if __name__ == "__main__":
    key = jax.random.PRNGKey(0)
    kx1, kp1, kx2, kp2 = jax.random.split(key, 4)

    fwd = jax.jit(residual_block)

    # --- test 1: module-sized toy shape (features=32, batch=8), f32 weights,
    # feature dim padded 32 -> 128 inside the wrapper, no batch padding ---
    features, batch = 32, 8
    x = jax.random.normal(kx1, (batch, features), dtype=jnp.float32)
    w1_t, b1, w2_t, b2 = _make_params(kp1, features)
    params_f32 = prepare_params(w1_t, b1, w2_t, b2, weight_dtype=jnp.float32)

    out_f32 = jax.block_until_ready(fwd(x, params_f32))
    ref_f32 = residual_block_ref(x, w1_t, b1, w2_t, b2, jnp.float32)
    assert out_f32.shape == (batch, features)
    assert jnp.allclose(out_f32, ref_f32, atol=1e-4, rtol=1e-4), \
        "f32 path mismatch vs reference"

    # --- test 2: bf16 fast path, lane-dense F=128 (no pads/slices), 2 grid steps ---
    features2, batch2 = 128, 512
    x2 = jax.random.normal(kx2, (batch2, features2), dtype=jnp.float32)
    w1_t2, b1_2, w2_t2, b2_2 = _make_params(kp2, features2)
    params_bf16 = prepare_params(w1_t2, b1_2, w2_t2, b2_2, weight_dtype=jnp.bfloat16)

    out_bf16 = jax.block_until_ready(fwd(x2, params_bf16))
    ref_bf16 = residual_block_ref(x2, w1_t2, b1_2, w2_t2, b2_2, jnp.bfloat16)
    assert out_bf16.shape == (batch2, features2)
    assert jnp.allclose(out_bf16, ref_bf16, atol=2e-2, rtol=2e-2), \
        "bf16 path mismatch vs reference"
    ref_exact = residual_block_ref(x2, w1_t2, b1_2, w2_t2, b2_2, jnp.float32)
    assert jnp.allclose(out_bf16, ref_exact, atol=1e-1, rtol=1e-1), \
        "bf16 path diverged from f32 module semantics"

    print("KERNEL_OK")
</pallas_src>

<mosaic_0001>
module attributes {stable_mosaic.version = 11 : i64} {
  func.func @residual_block_kernel(%arg0: i32, %arg1: memref<8x128xf32, #tpu.memory_space<vmem>>, %arg2: memref<128x128xf32, #tpu.memory_space<vmem>>, %arg3: memref<1x128xf32, #tpu.memory_space<vmem>>, %arg4: memref<128x128xf32, #tpu.memory_space<vmem>>, %arg5: memref<1x128xf32, #tpu.memory_space<vmem>>, %arg6: memref<8x128xf32, #tpu.memory_space<vmem>>) attributes {dimension_semantics = [#tpu.dimension_semantics<parallel>], iteration_bounds = array<i64: 1>, scalar_prefetch = 0 : i64, scratch_operands = 0 : i64, tpu.core_type = #tpu.core_type<tc>, window_params = [{transform_indices = @transform_0, window_bounds = array<i64: 8, 128>}, {pipeline_mode = #tpu.pipeline_mode<synchronous>, transform_indices = @transform_1, window_bounds = array<i64: 128, 128>}, {pipeline_mode = #tpu.pipeline_mode<synchronous>, transform_indices = @transform_2, window_bounds = array<i64: 1, 128>}, {pipeline_mode = #tpu.pipeline_mode<synchronous>, transform_indices = @transform_3, window_bounds = array<i64: 128, 128>}, {pipeline_mode = #tpu.pipeline_mode<synchronous>, transform_indices = @transform_4, window_bounds = array<i64: 1, 128>}, {transform_indices = @transform_5, window_bounds = array<i64: 8, 128>}]} {
    %c0 = arith.constant 0 : index
    %c0_0 = arith.constant 0 : index
    %0 = vector.load %arg1[%c0, %c0_0] : memref<8x128xf32, #tpu.memory_space<vmem>>, vector<8x128xf32>
    %c0_1 = arith.constant 0 : index
    %c0_2 = arith.constant 0 : index
    %1 = vector.load %arg2[%c0_1, %c0_2] : memref<128x128xf32, #tpu.memory_space<vmem>>, vector<128x128xf32>
    %cst = arith.constant dense<0.000000e+00> : vector<8x128xf32>
    %2 = tpu.matmul %0, %1, %cst {dimension_numbers = #tpu.dot_dimension_numbers<[1], [0], [0], [1], [0, 0, 1, 1], [], []>} : vector<8x128xf32>, vector<128x128xf32>, vector<8x128xf32> -> vector<8x128xf32>
    %c0_3 = arith.constant 0 : index
    %c0_4 = arith.constant 0 : index
    %3 = vector.load %arg3[%c0_3, %c0_4] : memref<1x128xf32, #tpu.memory_space<vmem>>, vector<1x128xf32>
    %4 = vector.broadcast %3 : vector<1x128xf32> to vector<8x128xf32>
    %5 = arith.addf %2, %4 : vector<8x128xf32>
    %cst_5 = arith.constant 0.000000e+00 : f32
    %6 = vector.broadcast %cst_5 : f32 to vector<8x128xf32>
    %7 = arith.maximumf %5, %6 : vector<8x128xf32>
    %c0_6 = arith.constant 0 : index
    %c0_7 = arith.constant 0 : index
    %8 = vector.load %arg4[%c0_6, %c0_7] : memref<128x128xf32, #tpu.memory_space<vmem>>, vector<128x128xf32>
    %cst_8 = arith.constant dense<0.000000e+00> : vector<8x128xf32>
    %9 = tpu.matmul %7, %8, %cst_8 {dimension_numbers = #tpu.dot_dimension_numbers<[1], [0], [0], [1], [0, 0, 1, 1], [], []>} : vector<8x128xf32>, vector<128x128xf32>, vector<8x128xf32> -> vector<8x128xf32>
    %c0_9 = arith.constant 0 : index
    %c0_10 = arith.constant 0 : index
    %10 = vector.load %arg5[%c0_9, %c0_10] : memref<1x128xf32, #tpu.memory_space<vmem>>, vector<1x128xf32>
    %11 = vector.broadcast %10 : vector<1x128xf32> to vector<8x128xf32>
    %12 = arith.addf %9, %11 : vector<8x128xf32>
    %13 = arith.addf %0, %12 : vector<8x128xf32>
    %c0_11 = arith.constant 0 : index
    %c0_12 = arith.constant 0 : index
    %14 = vector.load %arg6[%c0_11, %c0_12] : memref<8x128xf32, #tpu.memory_space<vmem>>, vector<8x128xf32>
    tpu.vector_store %arg6[%c0_11, %c0_12], %13 {strides = array<i32>} : memref<8x128xf32, #tpu.memory_space<vmem>>, vector<8x128xf32>,
    return
  }
  func.func @transform_0(%arg0: i32) -> (i32, i32) {
    %c0_i32 = arith.constant 0 : i32
    %c0_i32_0 = arith.constant 0 : i32
    return %arg0, %c0_i32 : i32, i32
  }
  func.func @transform_1(%arg0: i32) -> (i32, i32) {
    %c0_i32 = arith.constant 0 : i32
    %c0_i32_0 = arith.constant 0 : i32
    %c0_i32_1 = arith.constant 0 : i32
    return %c0_i32, %c0_i32_0 : i32, i32
  }
  func.func @transform_2(%arg0: i32) -> (i32, i32) {
    %c0_i32 = arith.constant 0 : i32
    %c0_i32_0 = arith.constant 0 : i32
    %c0_i32_1 = arith.constant 0 : i32
    return %c0_i32, %c0_i32_0 : i32, i32
  }
  func.func @transform_3(%arg0: i32) -> (i32, i32) {
    %c0_i32 = arith.constant 0 : i32
    %c0_i32_0 = arith.constant 0 : i32
    %c0_i32_1 = arith.constant 0 : i32
    return %c0_i32, %c0_i32_0 : i32, i32
  }
  func.func @transform_4(%arg0: i32) -> (i32, i32) {
    %c0_i32 = arith.constant 0 : i32
    %c0_i32_0 = arith.constant 0 : i32
    %c0_i32_1 = arith.constant 0 : i32
    return %c0_i32, %c0_i32_0 : i32, i32
  }
  func.func @transform_5(%arg0: i32) -> (i32, i32) {
    %c0_i32 = arith.constant 0 : i32
    %c0_i32_0 = arith.constant 0 : i32
    return %arg0, %c0_i32 : i32, i32
  }
}

</mosaic_0001>

<llo_original>
// kernel: residual_block.1
$region0: #{residual_block.1}
  #allocation0 [shape = 'u32[]', space=smem, size = 0x4, offset = 0x4, fixed_abs, tag = 'smem constant byte address 0x4 - core index']
  #allocation1 [shape = 'u32[144,128]{1,0:T(1,128)}', space=vmem, size = 0x12000, scoped, tag = 'internal scratch']
  %s0 = inlined_call_operand.vmem [shape: f32[8,128], index: 0, kind: input, shape index: {}]
  %s1 = inlined_call_operand.hbm [shape: f32[128,128], index: 1, kind: input, shape index: {}]
  %s2 = inlined_call_operand.vmem [shape: f32[1,128], index: 2, kind: input, shape index: {}]
  %s3 = inlined_call_operand.hbm [shape: f32[128,128], index: 3, kind: input, shape index: {}]
  %s4 = inlined_call_operand.vmem [shape: f32[1,128], index: 4, kind: input, shape index: {}]
  %s5 = inlined_call_operand.hbm [shape: f32[8,128], index: 5, kind: output, shape index: {}]
  %s6 = sld [smem:[#allocation0]]
  $region38: #{residual_block.1} parent=0
    _
  %s8 = ssub.s32 1, %s6
  %s9 = scalar_select 0, %s8, %s6
  $region1: #{residual_block.1} parent=0
    #allocation2 [shape = 'u8[65536]{0}', space=vmem, size = 0x10000, scoped, tag = 'input window, operand 1, single buffered']
    #allocation3 [shape = 's32[1]{0}', space=sflag, size = 0x4, scoped, tag = 'scoped memory for residual_block.1']
    #allocation4 [shape = 's32[1]{0}', space=sflag, size = 0x4, scoped, tag = 'scoped memory for residual_block.1']
    #allocation5 [shape = 'u8[65536]{0}', space=vmem, size = 0x10000, scoped, tag = 'input window, operand 3, single buffered']
    #allocation6 [shape = 's32[1]{0}', space=sflag, size = 0x4, scoped, tag = 'scoped memory for residual_block.1']
    #allocation7 [shape = 'u8[4096]{0}', space=vmem, size = 0x1000, scoped, tag = 'output window, operand 0, single buffered']
    %10 = vsyncpa [#allocation3], 0
    %11 = vsyncpa [#allocation6], 0
    %12 = vsyncpa [#allocation4], 0
    // Predicated region
    $region2: #{residual_block.1} parent=1 // pred_check
      _
    $region3: #{residual_block.1} parent=1 // pred_check_branch
      %14 = sbr.rel (0) target = $region5
    $region4: #{residual_block.1} parent=1 // pred_region
      _
    $region5: #{residual_block.1} parent=1 // pred_fallthru
      _
    // Predicated region
    $region6: #{residual_block.1} parent=1 // pred_check
      _
    $region7: #{residual_block.1} parent=1 // pred_check_branch
      %16 = sbr.rel (0) target = $region9
    $region8: #{residual_block.1} parent=1 // pred_region
      %s18 = ssub.s32 2048, 2048
      %19 = vsyncadd [#allocation3], %s18
      %s20 = sshll.u32 [#allocation2], 4
      %s21 = int_to_ptr.vmem [resolvable:$true] %s20
      %26 = dma.hbm_to_vmem [thread:$0]  %s1, 2048, %s21, [#allocation3], 128, 128, 8
    $region9: #{residual_block.1} parent=1 // pred_fallthru
      _
    // Predicated region
    $region10: #{residual_block.1} parent=1 // pred_check
      _
    $region11: #{residual_block.1} parent=1 // pred_check_branch
      %28 = sbr.rel (0) target = $region13
    $region12: #{residual_block.1} parent=1 // pred_region
      _
    $region13: #{residual_block.1} parent=1 // pred_fallthru
      _
    // Predicated region
    $region14: #{residual_block.1} parent=1 // pred_check
      _
    $region15: #{residual_block.1} parent=1 // pred_check_branch
      %30 = sbr.rel (0) target = $region17
    $region16: #{residual_block.1} parent=1 // pred_region
      %s32 = ssub.s32 2048, 2048
      %33 = vsyncadd [#allocation6], %s32
      %s34 = sshll.u32 [#allocation5], 4
      %s35 = int_to_ptr.vmem [resolvable:$true] %s34
      %40 = dma.hbm_to_vmem [thread:$0]  %s3, 2048, %s35, [#allocation6], 128, 128, 8
    $region17: #{residual_block.1} parent=1 // pred_fallthru
      _
    // Predicated region
    $region18: #{residual_block.1} parent=1 // pred_check
      _
    $region19: #{residual_block.1} parent=1 // pred_check_branch
      %42 = sbr.rel (0) target = $region21
    $region20: #{residual_block.1} parent=1 // pred_region
      _
    $region21: #{residual_block.1} parent=1 // pred_fallthru
      _
    // Predicated region
    $region22: #{residual_block.1} parent=1 // pred_check
      _
    $region23: #{residual_block.1} parent=1 // pred_check_branch
      %44 = sbr.rel (0) target = $region25
    $region24: #{residual_block.1} parent=1 // pred_region
      %45 = dma.done [#allocation3], 2048
    $region25: #{residual_block.1} parent=1 // pred_fallthru
      _
    // Predicated region
    $region26: #{residual_block.1} parent=1 // pred_check
      _
    $region27: #{residual_block.1} parent=1 // pred_check_branch
      %47 = sbr.rel (0) target = $region29
    $region28: #{residual_block.1} parent=1 // pred_region
      %48 = dma.done [#allocation6], 2048
    $region29: #{residual_block.1} parent=1 // pred_fallthru
      _
    %v49 = vld [vmem:[%s0] sm:$0xff]
    %v50 = vld [vmem:[#allocation2] sm:$0xff]
    %v51 = vld [vmem:[#allocation2 + $0x8] sm:$0xff]
    %v52 = vld [vmem:[#allocation2 + $0x10] sm:$0xff]
    %v53 = vld [vmem:[#allocation2 + $0x18] sm:$0xff]
    %v54 = vld [vmem:[#allocation2 + $0x20] sm:$0xff]
    %v55 = vld [vmem:[#allocation2 + $0x28] sm:$0xff]
    %v56 = vld [vmem:[#allocation2 + $0x30] sm:$0xff]
    %v57 = vld [vmem:[#allocation2 + $0x38] sm:$0xff]
    %v58 = vld [vmem:[#allocation2 + $0x40] sm:$0xff]
    %v59 = vld [vmem:[#allocation2 + $0x48] sm:$0xff]
    %v60 = vld [vmem:[#allocation2 + $0x50] sm:$0xff]
    %v61 = vld [vmem:[#allocation2 + $0x58] sm:$0xff]
    %v62 = vld [vmem:[#allocation2 + $0x60] sm:$0xff]
    %v63 = vld [vmem:[#allocation2 + $0x68] sm:$0xff]
    %v64 = vld [vmem:[#allocation2 + $0x70] sm:$0xff]
    %v65 = vld [vmem:[#allocation2 + $0x78] sm:$0xff]
    %v66 = vld [vmem:[%s2] sm:$0x1]
    %v68 = vlaneseq
    %v69 = vshrl.u32 %v68, 7
    %v70 = vsub.s32 0, %v69
    %v71 = vrot.slane %v66, %v70
    %73 = vmatprep.subr.mxu0 0.0
    %74 = vmatpush1.msra.mxu0 %v65
    %75 = vmatprep.subr.mxu0 0.0
    %76 = vmatpush1.msra.mxu0 %v64
    %77 = vmatprep.subr.mxu0 0.0
    %78 = vmatpush1.msra.mxu0 %v63
    %79 = vmatprep.subr.mxu0 0.0
    %80 = vmatpush1.msra.mxu0 %v62
    %81 = vmatprep.subr.mxu0 0.0
    %82 = vmatpush1.msra.mxu0 %v61
    %83 = vmatprep.subr.mxu0 0.0
    %84 = vmatpush1.msra.mxu0 %v60
    %85 = vmatprep.subr.mxu0 0.0
    %86 = vmatpush1.msra.mxu0 %v59
    %87 = vmatprep.subr.mxu0 0.0
    %88 = vmatpush1.msra.mxu0 %v58
    %89 = vmatprep.subr.mxu0 0.0
    %90 = vmatpush1.msra.mxu0 %v57
    %91 = vmatprep.subr.mxu0 0.0
    %92 = vmatpush1.msra.mxu0 %v56
    %93 = vmatprep.subr.mxu0 0.0
    %94 = vmatpush1.msra.mxu0 %v55
    %95 = vmatprep.subr.mxu0 0.0
    %96 = vmatpush1.msra.mxu0 %v54
    %97 = vmatprep.subr.mxu0 0.0
    %98 = vmatpush1.msra.mxu0 %v53
    %99 = vmatprep.subr.mxu0 0.0
    %100 = vmatpush1.msra.mxu0 %v52
    %101 = vmatprep.subr.mxu0 0.0
    %102 = vmatpush1.msra.mxu0 %v51
    %103 = vmatprep.subr.mxu0 0.0
    %104 = vmatpush1.msra.mxu0 %v50
    %105 = vmatprep.subr.mxu0 0.0
    %106 = vmatpush2.msra.mxu0 0.0
    %107 = vmatprep.subr.mxu0 0.0
    %108 = vmatpush2.msra.mxu0 0.0
    %109 = vmatprep.subr.mxu0 0.0
    %110 = vmatpush2.msra.mxu0 0.0
    %111 = vmatprep.subr.mxu0 0.0
    %112 = vmatpush2.msra.mxu0 0.0
    %113 = vmatprep.subr.mxu0 0.0
    %114 = vmatpush2.msra.mxu0 0.0
    %115 = vmatprep.subr.mxu0 0.0
    %116 = vmatpush2.msra.mxu0 0.0
    %117 = vmatprep.subr.mxu0 0.0
    %118 = vmatpush2.msra.mxu0 0.0
    %119 = vmatprep.subr.mxu0 0.0
    %120 = vmatpush2.msra.mxu0 0.0
    %121 = vmatprep.subr.mxu0 0.0
    %122 = vmatpush2.msra.mxu0 0.0
    %123 = vmatprep.subr.mxu0 0.0
    %124 = vmatpush2.msra.mxu0 0.0
    %125 = vmatprep.subr.mxu0 0.0
    %126 = vmatpush2.msra.mxu0 0.0
    %127 = vmatprep.subr.mxu0 0.0
    %128 = vmatpush2.msra.mxu0 0.0
    %129 = vmatprep.subr.mxu0 0.0
    %130 = vmatpush2.msra.mxu0 0.0
    %131 = vmatprep.subr.mxu0 0.0
    %132 = vmatpush2.msra.mxu0 0.0
    %133 = vmatprep.subr.mxu0 0.0
    %134 = vmatpush2.msra.mxu0 0.0
    %135 = vmatprep.subr.mxu0 0.0
    %136 = vmatpush2.msra.mxu0 0.0
    %137 = vmatprep.mubr.f32.mxu0 0.0
    %138 = vmatmul.mubr.f32.gmra.mxu0 %v49
    %v139 = vpop.f32.mrf.mxu0
    %v140 = vadd.f32 %v71, %v139
    %v141 = vpop.f32.mrf.mxu0
    %142 = vdwg.mxu0
    %v143 = vmax.f32 %v140, 0.0
    %v144 = vld [vmem:[#allocation5] sm:$0xff]
    %v145 = vld [vmem:[#allocation5 + $0x8] sm:$0xff]
    %v146 = vld [vmem:[#allocation5 + $0x10] sm:$0xff]
    %v147 = vld [vmem:[#allocation5 + $0x18] sm:$0xff]
    %v148 = vld [vmem:[#allocation5 + $0x20] sm:$0xff]
    %v149 = vld [vmem:[#allocation5 + $0x28] sm:$0xff]
    %v150 = vld [vmem:[#allocation5 + $0x30] sm:$0xff]
    %v151 = vld [vmem:[#allocation5 + $0x38] sm:$0xff]
    %v152 = vld [vmem:[#allocation5 + $0x40] sm:$0xff]
    %v153 = vld [vmem:[#allocation5 + $0x48] sm:$0xff]
    %v154 = vld [vmem:[#allocation5 + $0x50] sm:$0xff]
    %v155 = vld [vmem:[#allocation5 + $0x58] sm:$0xff]
    %v156 = vld [vmem:[#allocation5 + $0x60] sm:$0xff]
    %v157 = vld [vmem:[#allocation5 + $0x68] sm:$0xff]
    %v158 = vld [vmem:[#allocation5 + $0x70] sm:$0xff]
    %v159 = vld [vmem:[#allocation5 + $0x78] sm:$0xff]
    %v160 = vld [vmem:[%s4] sm:$0x1]
    %v162 = vlaneseq
    %v163 = vshrl.u32 %v162, 7
    %v164 = vsub.s32 0, %v163
    %v165 = vrot.slane %v160, %v164
    %167 = vmatprep.subr.mxu0 0.0
    %168 = vmatpush1.msra.mxu0 %v159
    %169 = vmatprep.subr.mxu0 0.0
    %170 = vmatpush1.msra.mxu0 %v158
    %171 = vmatprep.subr.mxu0 0.0
    %172 = vmatpush1.msra.mxu0 %v157
    %173 = vmatprep.subr.mxu0 0.0
    %174 = vmatpush1.msra.mxu0 %v156
    %175 = vmatprep.subr.mxu0 0.0
    %176 = vmatpush1.msra.mxu0 %v155
    %177 = vmatprep.subr.mxu0 0.0
    %178 = vmatpush1.msra.mxu0 %v154
    %179 = vmatprep.subr.mxu0 0.0
    %180 = vmatpush1.msra.mxu0 %v153
    %181 = vmatprep.subr.mxu0 0.0
    %182 = vmatpush1.msra.mxu0 %v152
    %183 = vmatprep.subr.mxu0 0.0
    %184 = vmatpush1.msra.mxu0 %v151
    %185 = vmatprep.subr.mxu0 0.0
    %186 = vmatpush1.msra.mxu0 %v150
    %187 = vmatprep.subr.mxu0 0.0
    %188 = vmatpush1.msra.mxu0 %v149
    %189 = vmatprep.subr.mxu0 0.0
    %190 = vmatpush1.msra.mxu0 %v148
    %191 = vmatprep.subr.mxu0 0.0
    %192 = vmatpush1.msra.mxu0 %v147
    %193 = vmatprep.subr.mxu0 0.0
    %194 = vmatpush1.msra.mxu0 %v146
    %195 = vmatprep.subr.mxu0 0.0
    %196 = vmatpush1.msra.mxu0 %v145
    %197 = vmatprep.subr.mxu0 0.0
    %198 = vmatpush1.msra.mxu0 %v144
    %199 = vmatprep.subr.mxu0 0.0
    %200 = vmatpush2.msra.mxu0 0.0
    %201 = vmatprep.subr.mxu0 0.0
    %202 = vmatpush2.msra.mxu0 0.0
    %203 = vmatprep.subr.mxu0 0.0
    %204 = vmatpush2.msra.mxu0 0.0
    %205 = vmatprep.subr.mxu0 0.0
    %206 = vmatpush2.msra.mxu0 0.0
    %207 = vmatprep.subr.mxu0 0.0
    %208 = vmatpush2.msra.mxu0 0.0
    %209 = vmatprep.subr.mxu0 0.0
    %210 = vmatpush2.msra.mxu0 0.0
    %211 = vmatprep.subr.mxu0 0.0
    %212 = vmatpush2.msra.mxu0 0.0
    %213 = vmatprep.subr.mxu0 0.0
    %214 = vmatpush2.msra.mxu0 0.0
    %215 = vmatprep.subr.mxu0 0.0
    %216 = vmatpush2.msra.mxu0 0.0
    %217 = vmatprep.subr.mxu0 0.0
    %218 = vmatpush2.msra.mxu0 0.0
    %219 = vmatprep.subr.mxu0 0.0
    %220 = vmatpush2.msra.mxu0 0.0
    %221 = vmatprep.subr.mxu0 0.0
    %222 = vmatpush2.msra.mxu0 0.0
    %223 = vmatprep.subr.mxu0 0.0
    %224 = vmatpush2.msra.mxu0 0.0
    %225 = vmatprep.subr.mxu0 0.0
    %226 = vmatpush2.msra.mxu0 0.0
    %227 = vmatprep.subr.mxu0 0.0
    %228 = vmatpush2.msra.mxu0 0.0
    %229 = vmatprep.subr.mxu0 0.0
    %230 = vmatpush2.msra.mxu0 0.0
    %231 = vmatprep.mubr.f32.mxu0 0.0
    %232 = vmatmul.mubr.f32.gmra.mxu0 %v143
    %v233 = vpop.f32.mrf.mxu0
    %v234 = vadd.f32 %v165, %v233
    %v235 = vpop.f32.mrf.mxu0
    %236 = vdwg.mxu0
    %v237 = vadd.f32 %v49, %v234
    %238 = vst [vmem:[#allocation7] sm:$0xff] %v237
    // Predicated region
    $region30: #{residual_block.1} parent=1 // pred_check
      _
    $region31: #{residual_block.1} parent=1 // pred_check_branch
      %240 = sbr.rel (0) target = $region33
    $region32: #{residual_block.1} parent=1 // pred_region
      %s242 = ssub.s32 128, 128
      %243 = vsyncadd [#allocation4], %s242
      %s245 = sshll.u32 [#allocation7], 4
      %s246 = int_to_ptr.vmem [resolvable:$true] %s245
      %248 = dma.vmem_to_hbm [thread:$0]  %s246, 128, %s5, [#allocation4]
    $region33: #{residual_block.1} parent=1 // pred_fallthru
      _
    // Predicated region
    $region34: #{residual_block.1} parent=1 // pred_check
      _
    $region35: #{residual_block.1} parent=1 // pred_check_branch
      %250 = sbr.rel (0) target = $region37
    $region36: #{residual_block.1} parent=1 // pred_region
      %251 = dma.done [#allocation4], 128
    $region37: #{residual_block.1} parent=1 // pred_fallthru
      _
    %252 = vsyncpa [#allocation3], 1
    %253 = vsyncpa [#allocation6], 1
    %254 = vsyncpa [#allocation4], 1

</llo_original>
